<compile_context>
chip_gen: v7x
topology: tpu7x:2x2x1
jax: 0.10.0
libtpu: 0.0.40
codegen_flags: <defaults>
</compile_context>

<pallas_src>
import jax
import jax.numpy as jnp
import numpy as np
from jax import lax
from jax.experimental import pallas as pl
from jax.experimental.pallas import tpu as pltpu

EPS = 1e-5  # BatchNorm1d default eps


def ca_layer_kernel(b1_ref, x_ref, wb_ref, g_ref, bt_ref, o_ref):
    # b1_ref : SMEM (Cm,)            conv #1 bias (scalar-prefetched)
    # x_ref  : VMEM (B, C, T)        input, flattened spatial positions on the lane axis
    # wb_ref : VMEM (2*Cm+1, C, 1)   packed [W1 (Cm rows); W2^T (Cm rows); b2 (1 row)]
    # g_ref, bt_ref: VMEM (C, T)     BatchNorm gamma / beta reshaped to (C, HW)
    x = x_ref[...]                       # (B, C, T)
    wb = wb_ref[...]                     # (2*Cm+1, C, 1)
    cm = (wb.shape[0] - 1) // 2          # channel // reduction — tiny, loops unroll at trace time

    # --- 1x1 conv #1 + ReLU on the VPU, keeping the size-1 channel axis ---
    # h_m[b,0,t] = relu(sum_c W1[m,c] * x[b,c,t] + b1[m])
    hs = []
    for m in range(cm):
        zm = jnp.sum(x * wb[m][None], axis=1, keepdims=True) + b1_ref[m]    # (B, 1, T)
        hs.append(jnp.maximum(zm, 0.0))

    # --- 1x1 conv #2 + sigmoid as VPU broadcast-FMAs (contraction length K = Cm) ---
    # s[b,c,t] = sigmoid(sum_m W2^T[m,c] * h_m[b,0,t] + b2[c])
    # (B,1,T) * (1,C,1) -> (B,C,T): pure stride-0 sublane/lane splats, no relayout.
    s = hs[0] * wb[cm][None]
    for m in range(1, cm):
        s = s + hs[m] * wb[cm + m][None]
    s = s + wb[2 * cm][None]             # b2 broadcast: (1, C, 1)
    # sigmoid = 1 / (1 + exp(-s)); exp and the approx reciprocal both go to the EUP.
    s = pl.reciprocal(1.0 + jnp.exp(-s), approx=True)

    # --- residual channel attention ---
    y = x * s + x                        # (B, C, T)

    # --- BatchNorm1d(4096), training mode: biased per-feature stats over the batch,
    #     folded into a single per-feature affine so the (B,C,T) slab only sees
    #     two VALU passes (mul + add). ---
    mean = jnp.mean(y, axis=0, keepdims=True)                     # (1, C, T)
    var = jnp.mean(jnp.square(y - mean), axis=0, keepdims=True)   # (1, C, T)
    inv = lax.rsqrt(var + EPS)
    scale = g_ref[...][None] * inv                                # (1, C, T)
    shift = bt_ref[...][None] - mean * scale                      # (1, C, T)
    o_ref[...] = y * scale + shift


def ca_layer(x, w1, b1, w2, b2, gamma, beta):
    """x: (B, C, H, W) f32 -> (B, C*H*W) f32, matching CALayer.forward (training-mode BN).

    Single grid step: the whole problem fits in VMEM and the kernel is
    launch-overhead-bound, so no spatial tiling is performed.
    """
    B, C, H, W = x.shape
    HW = H * W
    Cm = w1.shape[0]
    assert w1.shape == (Cm, C) and w2.shape == (C, Cm)
    assert b1.shape == (Cm,) and b2.shape == (C,)
    assert gamma.shape == (C * HW,) and beta.shape == (C * HW,)
    assert HW % 128 == 0, "spatial extent must stay lane-dense (multiple of 128)"

    x3 = x.reshape(B, C, HW)
    # Pack W1 / W2^T / b2 into one slab: one prologue DMA, one padded VMEM tile.
    wb = jnp.concatenate(
        [w1.reshape(Cm, C, 1),        # rows [0, Cm)      : W1, channel axis on sublanes
         w2.T.reshape(Cm, C, 1),      # rows [Cm, 2*Cm)   : W2^T, same layout
         b2.reshape(1, C, 1)],        # row  2*Cm         : b2
        axis=0)                       # (2*Cm+1, C, 1)
    g2 = gamma.reshape(C, HW)         # BN feature j = c*HW + hw  ->  (C, HW)
    bt2 = beta.reshape(C, HW)

    out = pl.pallas_call(
        ca_layer_kernel,
        out_shape=jax.ShapeDtypeStruct((B, C, HW), jnp.float32),
        grid_spec=pltpu.PrefetchScalarGridSpec(
            num_scalar_prefetch=1,                               # b1 -> SMEM scalars
            grid=(1,),
            in_specs=[
                pl.BlockSpec((B, C, HW), lambda i, b1: (0, 0, 0)),          # x (full)
                pl.BlockSpec((2 * Cm + 1, C, 1), lambda i, b1: (0, 0, 0)),  # packed weights
                pl.BlockSpec((C, HW), lambda i, b1: (0, 0)),                # gamma
                pl.BlockSpec((C, HW), lambda i, b1: (0, 0)),                # beta
            ],
            out_specs=pl.BlockSpec((B, C, HW), lambda i, b1: (0, 0, 0)),
        ),
        compiler_params=pltpu.CompilerParams(dimension_semantics=("arbitrary",)),
    )(b1, x3, wb, g2, bt2)

    return out.reshape(B, C * HW)


def ca_layer_ref(x, w1, b1, w2, b2, gamma, beta):
    """Pure-JAX reference (mirrors the PyTorch forward in training mode)."""
    B = x.shape[0]
    h = jnp.einsum("mc,bchw->bmhw", w1, x) + b1[None, :, None, None]
    h = jnp.maximum(h, 0.0)
    s = jnp.einsum("cm,bmhw->bchw", w2, h) + b2[None, :, None, None]
    s = jax.nn.sigmoid(s)
    y = x * s + x
    yf = y.reshape(B, -1)
    mean = yf.mean(axis=0, keepdims=True)
    var = ((yf - mean) ** 2).mean(axis=0, keepdims=True)
    return (yf - mean) / jnp.sqrt(var + EPS) * gamma[None] + beta[None]


if __name__ == "__main__":
    # BatchNorm1d(4096) forces C*H*W == 4096.  B=4, C=16, H=W=16, reduction=8 -> Cm=2.
    B, C, H, W = 4, 16, 16, 16
    reduction = 8
    Cm = C // reduction

    key = jax.random.PRNGKey(0)
    kx, k1, k2, k3, k4, k5, k6 = jax.random.split(key, 7)

    x = jax.random.normal(kx, (B, C, H, W), dtype=jnp.float32)
    # Conv2d(channel, channel//reduction, 1, bias=True): weight (Cm, C), bias (Cm,)
    w1 = jax.random.normal(k1, (Cm, C), dtype=jnp.float32) * 0.2
    b1 = jax.random.normal(k2, (Cm,), dtype=jnp.float32) * 0.1
    # Conv2d(channel//reduction, channel, 1, bias=True): weight (C, Cm), bias (C,)
    w2 = jax.random.normal(k3, (C, Cm), dtype=jnp.float32) * 0.2
    b2 = jax.random.normal(k4, (C,), dtype=jnp.float32) * 0.1
    # BatchNorm1d(4096) affine params
    gamma = 1.0 + 0.1 * jax.random.normal(k5, (C * H * W,), dtype=jnp.float32)
    beta = 0.1 * jax.random.normal(k6, (C * H * W,), dtype=jnp.float32)

    out = ca_layer(x, w1, b1, w2, b2, gamma, beta)
    out = jax.block_until_ready(out)

    ref = jax.block_until_ready(ca_layer_ref(x, w1, b1, w2, b2, gamma, beta))
    np.testing.assert_allclose(np.asarray(out), np.asarray(ref), rtol=5e-3, atol=5e-3)

    # TODO(synk): BatchNorm1d running-mean/var buffer updates (training side effect) are
    # not materialized; only the returned tensor of the forward pass is produced.
    print("KERNEL_OK")
</pallas_src>

<mosaic_0001>
module attributes {stable_mosaic.version = 11 : i64} {
  func.func @ca_layer_kernel(%arg0: i32, %arg1: memref<2xf32, #tpu.memory_space<smem>>, %arg2: memref<4x16x256xf32, #tpu.memory_space<vmem>>, %arg3: memref<5x16x1xf32, #tpu.memory_space<vmem>>, %arg4: memref<16x256xf32, #tpu.memory_space<vmem>>, %arg5: memref<16x256xf32, #tpu.memory_space<vmem>>, %arg6: memref<4x16x256xf32, #tpu.memory_space<vmem>>) attributes {dimension_semantics = [#tpu.dimension_semantics<arbitrary>], iteration_bounds = array<i64: 1>, scalar_prefetch = 1 : i64, scratch_operands = 0 : i64, tpu.core_type = #tpu.core_type<tc>, window_params = [{pipeline_mode = #tpu.pipeline_mode<synchronous>, transform_indices = @transform_0, window_bounds = array<i64: 4, 16, 256>}, {pipeline_mode = #tpu.pipeline_mode<synchronous>, transform_indices = @transform_1, window_bounds = array<i64: 5, 16, 1>}, {pipeline_mode = #tpu.pipeline_mode<synchronous>, transform_indices = @transform_2, window_bounds = array<i64: 16, 256>}, {pipeline_mode = #tpu.pipeline_mode<synchronous>, transform_indices = @transform_3, window_bounds = array<i64: 16, 256>}, {pipeline_mode = #tpu.pipeline_mode<synchronous>, transform_indices = @transform_4, window_bounds = array<i64: 4, 16, 256>}]} {
    %c0 = arith.constant 0 : index
    %c0_0 = arith.constant 0 : index
    %c0_1 = arith.constant 0 : index
    %0 = vector.load %arg2[%c0, %c0_0, %c0_1] : memref<4x16x256xf32, #tpu.memory_space<vmem>>, vector<4x16x256xf32>
    %c0_2 = arith.constant 0 : index
    %c0_3 = arith.constant 0 : index
    %c0_4 = arith.constant 0 : index
    %1 = vector.load %arg3[%c0_2, %c0_3, %c0_4] : memref<5x16x1xf32, #tpu.memory_space<vmem>>, vector<5x16x1xf32>
    %2 = vector.extract_strided_slice %1 {offsets = [0, 0, 0], sizes = [1, 16, 1], strides = [1, 1, 1]} : vector<5x16x1xf32> to vector<1x16x1xf32>
    %3 = vector.shape_cast %2 : vector<1x16x1xf32> to vector<16x1xf32>
    %4 = vector.shape_cast %3 : vector<16x1xf32> to vector<1x16x1xf32>
    %5 = vector.broadcast %4 : vector<1x16x1xf32> to vector<4x16x256xf32>
    %6 = arith.mulf %0, %5 : vector<4x16x256xf32>
    %cst = arith.constant dense<0.000000e+00> : vector<4x256xf32>
    %7 = vector.multi_reduction <add>, %6, %cst [1] : vector<4x16x256xf32> to vector<4x256xf32>
    %8 = vector.shape_cast %7 : vector<4x256xf32> to vector<4x1x256xf32>
    %c0_5 = arith.constant 0 : index
    %9 = memref.load %arg1[%c0_5] : memref<2xf32, #tpu.memory_space<smem>>
    %10 = vector.broadcast %9 : f32 to vector<4x1x256xf32>
    %11 = arith.addf %8, %10 : vector<4x1x256xf32>
    %cst_6 = arith.constant 0.000000e+00 : f32
    %12 = vector.broadcast %cst_6 : f32 to vector<4x1x256xf32>
    %13 = arith.maximumf %11, %12 : vector<4x1x256xf32>
    %14 = vector.extract_strided_slice %1 {offsets = [1, 0, 0], sizes = [1, 16, 1], strides = [1, 1, 1]} : vector<5x16x1xf32> to vector<1x16x1xf32>
    %15 = vector.shape_cast %14 : vector<1x16x1xf32> to vector<16x1xf32>
    %16 = vector.shape_cast %15 : vector<16x1xf32> to vector<1x16x1xf32>
    %17 = vector.broadcast %16 : vector<1x16x1xf32> to vector<4x16x256xf32>
    %18 = arith.mulf %0, %17 : vector<4x16x256xf32>
    %cst_7 = arith.constant dense<0.000000e+00> : vector<4x256xf32>
    %19 = vector.multi_reduction <add>, %18, %cst_7 [1] : vector<4x16x256xf32> to vector<4x256xf32>
    %20 = vector.shape_cast %19 : vector<4x256xf32> to vector<4x1x256xf32>
    %c1 = arith.constant 1 : index
    %21 = memref.load %arg1[%c1] : memref<2xf32, #tpu.memory_space<smem>>
    %22 = vector.broadcast %21 : f32 to vector<4x1x256xf32>
    %23 = arith.addf %20, %22 : vector<4x1x256xf32>
    %cst_8 = arith.constant 0.000000e+00 : f32
    %24 = vector.broadcast %cst_8 : f32 to vector<4x1x256xf32>
    %25 = arith.maximumf %23, %24 : vector<4x1x256xf32>
    %26 = vector.extract_strided_slice %1 {offsets = [2, 0, 0], sizes = [1, 16, 1], strides = [1, 1, 1]} : vector<5x16x1xf32> to vector<1x16x1xf32>
    %27 = vector.shape_cast %26 : vector<1x16x1xf32> to vector<16x1xf32>
    %28 = vector.shape_cast %27 : vector<16x1xf32> to vector<1x16x1xf32>
    %29 = vector.broadcast %13 : vector<4x1x256xf32> to vector<4x16x256xf32>
    %30 = vector.broadcast %28 : vector<1x16x1xf32> to vector<4x16x256xf32>
    %31 = arith.mulf %29, %30 : vector<4x16x256xf32>
    %32 = vector.extract_strided_slice %1 {offsets = [3, 0, 0], sizes = [1, 16, 1], strides = [1, 1, 1]} : vector<5x16x1xf32> to vector<1x16x1xf32>
    %33 = vector.shape_cast %32 : vector<1x16x1xf32> to vector<16x1xf32>
    %34 = vector.shape_cast %33 : vector<16x1xf32> to vector<1x16x1xf32>
    %35 = vector.broadcast %25 : vector<4x1x256xf32> to vector<4x16x256xf32>
    %36 = vector.broadcast %34 : vector<1x16x1xf32> to vector<4x16x256xf32>
    %37 = arith.mulf %35, %36 : vector<4x16x256xf32>
    %38 = arith.addf %31, %37 : vector<4x16x256xf32>
    %39 = vector.extract_strided_slice %1 {offsets = [4, 0, 0], sizes = [1, 16, 1], strides = [1, 1, 1]} : vector<5x16x1xf32> to vector<1x16x1xf32>
    %40 = vector.shape_cast %39 : vector<1x16x1xf32> to vector<16x1xf32>
    %41 = vector.shape_cast %40 : vector<16x1xf32> to vector<1x16x1xf32>
    %42 = vector.broadcast %41 : vector<1x16x1xf32> to vector<4x16x256xf32>
    %43 = arith.addf %38, %42 : vector<4x16x256xf32>
    %cst_9 = arith.constant 0.000000e+00 : f32
    %44 = vector.broadcast %cst_9 : f32 to vector<4x16x256xf32>
    %45 = arith.subf %44, %43 : vector<4x16x256xf32>
    %46 = math.exp %45 : vector<4x16x256xf32>
    %cst_10 = arith.constant 1.000000e+00 : f32
    %47 = vector.broadcast %cst_10 : f32 to vector<4x16x256xf32>
    %48 = arith.addf %47, %46 : vector<4x16x256xf32>
    %49 = tpu.reciprocal %48 {approx = true} : vector<4x16x256xf32> -> vector<4x16x256xf32>
    %50 = arith.mulf %0, %49 : vector<4x16x256xf32>
    %51 = arith.addf %50, %0 : vector<4x16x256xf32>
    %cst_11 = arith.constant dense<0.000000e+00> : vector<16x256xf32>
    %52 = vector.multi_reduction <add>, %51, %cst_11 [0] : vector<4x16x256xf32> to vector<16x256xf32>
    %53 = vector.shape_cast %52 : vector<16x256xf32> to vector<1x16x256xf32>
    %cst_12 = arith.constant 4.000000e+00 : f32
    %54 = vector.broadcast %cst_12 : f32 to vector<1x16x256xf32>
    %55 = arith.divf %53, %54 : vector<1x16x256xf32>
    %56 = vector.broadcast %55 : vector<1x16x256xf32> to vector<4x16x256xf32>
    %57 = arith.subf %51, %56 : vector<4x16x256xf32>
    %58 = arith.mulf %57, %57 : vector<4x16x256xf32>
    %cst_13 = arith.constant dense<0.000000e+00> : vector<16x256xf32>
    %59 = vector.multi_reduction <add>, %58, %cst_13 [0] : vector<4x16x256xf32> to vector<16x256xf32>
    %60 = vector.shape_cast %59 : vector<16x256xf32> to vector<1x16x256xf32>
    %cst_14 = arith.constant 4.000000e+00 : f32
    %61 = vector.broadcast %cst_14 : f32 to vector<1x16x256xf32>
    %62 = arith.divf %60, %61 : vector<1x16x256xf32>
    %cst_15 = arith.constant 9.99999974E-6 : f32
    %63 = vector.broadcast %cst_15 : f32 to vector<1x16x256xf32>
    %64 = arith.addf %62, %63 : vector<1x16x256xf32>
    %65 = math.rsqrt %64 : vector<1x16x256xf32>
    %c0_16 = arith.constant 0 : index
    %c0_17 = arith.constant 0 : index
    %66 = vector.load %arg4[%c0_16, %c0_17] : memref<16x256xf32, #tpu.memory_space<vmem>>, vector<16x256xf32>
    %67 = vector.shape_cast %66 : vector<16x256xf32> to vector<1x16x256xf32>
    %68 = arith.mulf %67, %65 : vector<1x16x256xf32>
    %c0_18 = arith.constant 0 : index
    %c0_19 = arith.constant 0 : index
    %69 = vector.load %arg5[%c0_18, %c0_19] : memref<16x256xf32, #tpu.memory_space<vmem>>, vector<16x256xf32>
    %70 = vector.shape_cast %69 : vector<16x256xf32> to vector<1x16x256xf32>
    %71 = arith.mulf %55, %68 : vector<1x16x256xf32>
    %72 = arith.subf %70, %71 : vector<1x16x256xf32>
    %73 = vector.broadcast %68 : vector<1x16x256xf32> to vector<4x16x256xf32>
    %74 = arith.mulf %51, %73 : vector<4x16x256xf32>
    %75 = vector.broadcast %72 : vector<1x16x256xf32> to vector<4x16x256xf32>
    %76 = arith.addf %74, %75 : vector<4x16x256xf32>
    %c0_20 = arith.constant 0 : index
    %c0_21 = arith.constant 0 : index
    %c0_22 = arith.constant 0 : index
    %77 = vector.load %arg6[%c0_20, %c0_21, %c0_22] : memref<4x16x256xf32, #tpu.memory_space<vmem>>, vector<4x16x256xf32>
    tpu.vector_store %arg6[%c0_20, %c0_21, %c0_22], %76 {strides = array<i32>} : memref<4x16x256xf32, #tpu.memory_space<vmem>>, vector<4x16x256xf32>,
    return
  }
  func.func @transform_0(%arg0: i32, %arg1: memref<2xf32, #tpu.memory_space<smem>>) -> (i32, i32, i32) {
    %c0_i32 = arith.constant 0 : i32
    %c0_i32_0 = arith.constant 0 : i32
    %c0_i32_1 = arith.constant 0 : i32
    %c0_i32_2 = arith.constant 0 : i32
    return %c0_i32, %c0_i32_0, %c0_i32_1 : i32, i32, i32
  }
  func.func @transform_1(%arg0: i32, %arg1: memref<2xf32, #tpu.memory_space<smem>>) -> (i32, i32, i32) {
    %c0_i32 = arith.constant 0 : i32
    %c0_i32_0 = arith.constant 0 : i32
    %c0_i32_1 = arith.constant 0 : i32
    %c0_i32_2 = arith.constant 0 : i32
    return %c0_i32, %c0_i32_0, %c0_i32_1 : i32, i32, i32
  }
  func.func @transform_2(%arg0: i32, %arg1: memref<2xf32, #tpu.memory_space<smem>>) -> (i32, i32) {
    %c0_i32 = arith.constant 0 : i32
    %c0_i32_0 = arith.constant 0 : i32
    %c0_i32_1 = arith.constant 0 : i32
    return %c0_i32, %c0_i32_0 : i32, i32
  }
  func.func @transform_3(%arg0: i32, %arg1: memref<2xf32, #tpu.memory_space<smem>>) -> (i32, i32) {
    %c0_i32 = arith.constant 0 : i32
    %c0_i32_0 = arith.constant 0 : i32
    %c0_i32_1 = arith.constant 0 : i32
    return %c0_i32, %c0_i32_0 : i32, i32
  }
  func.func @transform_4(%arg0: i32, %arg1: memref<2xf32, #tpu.memory_space<smem>>) -> (i32, i32, i32) {
    %c0_i32 = arith.constant 0 : i32
    %c0_i32_0 = arith.constant 0 : i32
    %c0_i32_1 = arith.constant 0 : i32
    %c0_i32_2 = arith.constant 0 : i32
    return %c0_i32, %c0_i32_0, %c0_i32_1 : i32, i32, i32
  }
}

</mosaic_0001>

<llo_original>
// kernel: tpu_custom_call.1
$region0: #{tpu_custom_call.1}
  #allocation0 [shape = 'u32[]', space=smem, size = 0x4, offset = 0x4, fixed_abs, tag = 'smem constant byte address 0x4 - core index']
  #allocation1 [shape = 'u32[144,128]{1,0:T(1,128)}', space=vmem, size = 0x12000, scoped, tag = 'internal scratch']
  #allocation2 [shape = 's32[1]{0}', space=sflag, size = 0x4, scoped, tag = 'scoped memory for tpu_custom_call.1']
  #allocation3 [shape = 'u8[512]{0}', space=smem, size = 0x200, scoped, tag = 'prefetched SMEM operand 0']
  %s0 = inlined_call_operand.vmem [shape: f32[2], index: 0, kind: input, shape index: {}]
  %s1 = inlined_call_operand.hbm [shape: f32[4,16,256], index: 1, kind: input, shape index: {}]
  %s2 = inlined_call_operand.vmem [shape: f32[5,16,1], index: 2, kind: input, shape index: {}]
  %s3 = inlined_call_operand.vmem [shape: f32[16,256], index: 3, kind: input, shape index: {}]
  %s4 = inlined_call_operand.vmem [shape: f32[16,256], index: 4, kind: input, shape index: {}]
  %s5 = inlined_call_operand.hbm [shape: f32[4,16,256], index: 5, kind: output, shape index: {}]
  %s6 = sld [smem:[#allocation0]]
  $region30: #{tpu_custom_call.1} parent=0
    _
  %s8 = ssub.s32 1, %s6
  %s9 = scalar_select 0, %s8, %s6
  %s10 = sshll.u32 %s0, 4
  %s11 = int_to_ptr.vmem [resolvable:$true] %s10
  %13 = dma.vmem_to_smem %s11, 16, [#allocation3], [#allocation2]
  %14 = dma.done [#allocation2], 16
  %15 = sfence
  $region1: #{tpu_custom_call.1} parent=0
    #allocation4 [shape = 'u8[65536]{0}', space=vmem, size = 0x10000, scoped, tag = 'input window, operand 1, single buffered']
    #allocation5 [shape = 's32[1]{0}', space=sflag, size = 0x4, scoped, tag = 'scoped memory for tpu_custom_call.1']
    #allocation6 [shape = 's32[1]{0}', space=sflag, size = 0x4, scoped, tag = 'scoped memory for tpu_custom_call.1']
    #allocation7 [shape = 'u8[65536]{0}', space=vmem, size = 0x10000, scoped, tag = 'output window, operand 0, single buffered']
    %16 = vsyncpa [#allocation5], 0
    %17 = vsyncpa [#allocation6], 0
    // Predicated region
    $region2: #{tpu_custom_call.1} parent=1 // pred_check
      _
    $region3: #{tpu_custom_call.1} parent=1 // pred_check_branch
      %19 = sbr.rel (0) target = $region5
    $region4: #{tpu_custom_call.1} parent=1 // pred_region
      %s21 = ssub.s32 2048, 2048
      %22 = vsyncadd [#allocation5], %s21
      %s23 = sshll.u32 [#allocation4], 4
      %s24 = int_to_ptr.vmem [resolvable:$true] %s23
      %29 = dma.hbm_to_vmem [thread:$0]  %s1, 2048, %s24, [#allocation5], 256, 256, 16
    $region5: #{tpu_custom_call.1} parent=1 // pred_fallthru
      _
    // Predicated region
    $region6: #{tpu_custom_call.1} parent=1 // pred_check
      _
    $region7: #{tpu_custom_call.1} parent=1 // pred_check_branch
      %31 = sbr.rel (0) target = $region9
    $region8: #{tpu_custom_call.1} parent=1 // pred_region
      _
    $region9: #{tpu_custom_call.1} parent=1 // pred_fallthru
      _
    // Predicated region
    $region10: #{tpu_custom_call.1} parent=1 // pred_check
      _
    $region11: #{tpu_custom_call.1} parent=1 // pred_check_branch
      %33 = sbr.rel (0) target = $region13
    $region12: #{tpu_custom_call.1} parent=1 // pred_region
      _
    $region13: #{tpu_custom_call.1} parent=1 // pred_fallthru
      _
    // Predicated region
    $region14: #{tpu_custom_call.1} parent=1 // pred_check
      _
    $region15: #{tpu_custom_call.1} parent=1 // pred_check_branch
      %35 = sbr.rel (0) target = $region17
    $region16: #{tpu_custom_call.1} parent=1 // pred_region
      _
    $region17: #{tpu_custom_call.1} parent=1 // pred_fallthru
      _
    // Predicated region
    $region18: #{tpu_custom_call.1} parent=1 // pred_check
      _
    $region19: #{tpu_custom_call.1} parent=1 // pred_check_branch
      %37 = sbr.rel (0) target = $region21
    $region20: #{tpu_custom_call.1} parent=1 // pred_region
      %38 = dma.done [#allocation5], 2048
    $region21: #{tpu_custom_call.1} parent=1 // pred_fallthru
      _
    %v39 = vld [vmem:[#allocation4] sm:$0xff]
    %v40 = vld [vmem:[#allocation4 + $0x8] sm:$0xff]
    %v41 = vld [vmem:[#allocation4 + $0x10] sm:$0xff]
    %v42 = vld [vmem:[#allocation4 + $0x18] sm:$0xff]
    %v43 = vld [vmem:[#allocation4 + $0x20] sm:$0xff]
    %v44 = vld [vmem:[#allocation4 + $0x28] sm:$0xff]
    %v45 = vld [vmem:[#allocation4 + $0x30] sm:$0xff]
    %v46 = vld [vmem:[#allocation4 + $0x38] sm:$0xff]
    %v47 = vld [vmem:[#allocation4 + $0x40] sm:$0xff]
    %v48 = vld [vmem:[#allocation4 + $0x48] sm:$0xff]
    %v49 = vld [vmem:[#allocation4 + $0x50] sm:$0xff]
    %v50 = vld [vmem:[#allocation4 + $0x58] sm:$0xff]
    %v51 = vld [vmem:[#allocation4 + $0x60] sm:$0xff]
    %v52 = vld [vmem:[#allocation4 + $0x68] sm:$0xff]
    %v53 = vld [vmem:[#allocation4 + $0x70] sm:$0xff]
    %v54 = vld [vmem:[#allocation4 + $0x78] sm:$0xff]
    %v55 = vld [vmem:[%s2] sm:$0xff]
    %v56 = vld [vmem:[%s2 + $0x8] sm:$0xff]
    %v57 = vld [vmem:[%s2 + $0x10] sm:$0xff]
    %v58 = vld [vmem:[%s2 + $0x18] sm:$0xff]
    %v59 = vld [vmem:[%s2 + $0x20] sm:$0xff]
    %v60 = vld [vmem:[%s2 + $0x28] sm:$0xff]
    %v61 = vld [vmem:[%s2 + $0x30] sm:$0xff]
    %v62 = vld [vmem:[%s2 + $0x38] sm:$0xff]
    %v63 = vld [vmem:[%s2 + $0x40] sm:$0xff]
    %v64 = vld [vmem:[%s2 + $0x48] sm:$0xff]
    %66 = vset.pattern.permute.xlu0 0
    %67 = vperm.xlu0 %66, %v55
    %v68 = vpop.permute.xlu0 %67
    %71 = vset.pattern.permute.xlu0 0
    %72 = vperm.xlu0 %71, %v56
    %v73 = vpop.permute.xlu0 %72
    %v75 = vmul.f32 %v39, %v68
    %v76 = vmul.f32 %v40, %v68
    %v77 = vmul.f32 %v41, %v73
    %v78 = vmul.f32 %v42, %v73
    %v79 = vmul.f32 %v43, %v68
    %v80 = vmul.f32 %v44, %v68
    %v81 = vmul.f32 %v45, %v73
    %v82 = vmul.f32 %v46, %v73
    %v83 = vmul.f32 %v47, %v68
    %v84 = vmul.f32 %v48, %v68
    %v85 = vmul.f32 %v49, %v73
    %v86 = vmul.f32 %v50, %v73
    %v87 = vmul.f32 %v51, %v68
    %v88 = vmul.f32 %v52, %v68
    %v89 = vmul.f32 %v53, %v73
    %v90 = vmul.f32 %v54, %v73
    %v91 = vadd.f32 %v75, %v77
    %v92 = vrot.slane %v91, 4
    %v93 = vadd.f32 %v91, %v92
    %v94 = vrot.slane %v93, 2
    %v95 = vadd.f32 %v93, %v94
    %v96 = vrot.slane %v95, 1
    %v97 = vadd.f32 %v95, %v96
    %v98 = vadd.f32 %v76, %v78
    %v99 = vrot.slane %v98, 4
    %v100 = vadd.f32 %v98, %v99
    %v101 = vrot.slane %v100, 2
    %v102 = vadd.f32 %v100, %v101
    %v103 = vrot.slane %v102, 1
    %v104 = vadd.f32 %v102, %v103
    %v105 = vadd.f32 %v79, %v81
    %v106 = vrot.slane %v105, 4
    %v107 = vadd.f32 %v105, %v106
    %v108 = vrot.slane %v107, 2
    %v109 = vadd.f32 %v107, %v108
    %v110 = vrot.slane %v109, 1
    %v111 = vadd.f32 %v109, %v110
    %v112 = vadd.f32 %v80, %v82
    %v113 = vrot.slane %v112, 4
    %v114 = vadd.f32 %v112, %v113
    %v115 = vrot.slane %v114, 2
    %v116 = vadd.f32 %v114, %v115
    %v117 = vrot.slane %v116, 1
    %v118 = vadd.f32 %v116, %v117
    %v119 = vadd.f32 %v83, %v85
    %v120 = vrot.slane %v119, 4
    %v121 = vadd.f32 %v119, %v120
    %v122 = vrot.slane %v121, 2
    %v123 = vadd.f32 %v121, %v122
    %v124 = vrot.slane %v123, 1
    %v125 = vadd.f32 %v123, %v124
    %v126 = vadd.f32 %v84, %v86
    %v127 = vrot.slane %v126, 4
    %v128 = vadd.f32 %v126, %v127
    %v129 = vrot.slane %v128, 2
    %v130 = vadd.f32 %v128, %v129
    %v131 = vrot.slane %v130, 1
    %v132 = vadd.f32 %v130, %v131
    %v133 = vadd.f32 %v87, %v89
    %v134 = vrot.slane %v133, 4
    %v135 = vadd.f32 %v133, %v134
    %v136 = vrot.slane %v135, 2
    %v137 = vadd.f32 %v135, %v136
    %v138 = vrot.slane %v137, 1
    %v139 = vadd.f32 %v137, %v138
    %v140 = vadd.f32 %v88, %v90
    %v141 = vrot.slane %v140, 4
    %v142 = vadd.f32 %v140, %v141
    %v143 = vrot.slane %v142, 2
    %v144 = vadd.f32 %v142, %v143
    %v145 = vrot.slane %v144, 1
    %v146 = vadd.f32 %v144, %v145
    %s147 = sld [smem:[#allocation3]]
    %v148 = vstv %s147
    %v149 = vadd.f32 %v97, %v148
    %v150 = vadd.f32 %v104, %v148
    %v151 = vadd.f32 %v111, %v148
    %v152 = vadd.f32 %v118, %v148
    %v153 = vadd.f32 %v125, %v148
    %v154 = vadd.f32 %v132, %v148
    %v155 = vadd.f32 %v139, %v148
    %v156 = vadd.f32 %v146, %v148
    %v157 = vmax.f32 %v149, 0.0
    %v158 = vmax.f32 %v150, 0.0
    %v159 = vmax.f32 %v151, 0.0
    %v160 = vmax.f32 %v152, 0.0
    %v161 = vmax.f32 %v153, 0.0
    %v162 = vmax.f32 %v154, 0.0
    %v163 = vmax.f32 %v155, 0.0
    %v164 = vmax.f32 %v156, 0.0
    %166 = vset.pattern.permute.xlu0 0
    %167 = vperm.xlu0 %166, %v57
    %v168 = vpop.permute.xlu0 %167
    %171 = vset.pattern.permute.xlu0 0
    %172 = vperm.xlu0 %171, %v58
    %v173 = vpop.permute.xlu0 %172
    %v175 = vmul.f32 %v39, %v168
    %v176 = vmul.f32 %v40, %v168
    %v177 = vmul.f32 %v41, %v173
    %v178 = vmul.f32 %v42, %v173
    %v179 = vmul.f32 %v43, %v168
    %v180 = vmul.f32 %v44, %v168
    %v181 = vmul.f32 %v45, %v173
    %v182 = vmul.f32 %v46, %v173
    %v183 = vmul.f32 %v47, %v168
    %v184 = vmul.f32 %v48, %v168
    %v185 = vmul.f32 %v49, %v173
    %v186 = vmul.f32 %v50, %v173
    %v187 = vmul.f32 %v51, %v168
    %v188 = vmul.f32 %v52, %v168
    %v189 = vmul.f32 %v53, %v173
    %v190 = vmul.f32 %v54, %v173
    %v191 = vadd.f32 %v175, %v177
    %v192 = vrot.slane %v191, 4
    %v193 = vadd.f32 %v191, %v192
    %v194 = vrot.slane %v193, 2
    %v195 = vadd.f32 %v193, %v194
    %v196 = vrot.slane %v195, 1
    %v197 = vadd.f32 %v195, %v196
    %v198 = vadd.f32 %v176, %v178
    %v199 = vrot.slane %v198, 4
    %v200 = vadd.f32 %v198, %v199
    %v201 = vrot.slane %v200, 2
    %v202 = vadd.f32 %v200, %v201
    %v203 = vrot.slane %v202, 1
    %v204 = vadd.f32 %v202, %v203
    %v205 = vadd.f32 %v179, %v181
    %v206 = vrot.slane %v205, 4
    %v207 = vadd.f32 %v205, %v206
    %v208 = vrot.slane %v207, 2
    %v209 = vadd.f32 %v207, %v208
    %v210 = vrot.slane %v209, 1
    %v211 = vadd.f32 %v209, %v210
    %v212 = vadd.f32 %v180, %v182
    %v213 = vrot.slane %v212, 4
    %v214 = vadd.f32 %v212, %v213
    %v215 = vrot.slane %v214, 2
    %v216 = vadd.f32 %v214, %v215
    %v217 = vrot.slane %v216, 1
    %v218 = vadd.f32 %v216, %v217
    %v219 = vadd.f32 %v183, %v185
    %v220 = vrot.slane %v219, 4
    %v221 = vadd.f32 %v219, %v220
    %v222 = vrot.slane %v221, 2
    %v223 = vadd.f32 %v221, %v222
    %v224 = vrot.slane %v223, 1
    %v225 = vadd.f32 %v223, %v224
    %v226 = vadd.f32 %v184, %v186
    %v227 = vrot.slane %v226, 4
    %v228 = vadd.f32 %v226, %v227
    %v229 = vrot.slane %v228, 2
    %v230 = vadd.f32 %v228, %v229
    %v231 = vrot.slane %v230, 1
    %v232 = vadd.f32 %v230, %v231
    %v233 = vadd.f32 %v187, %v189
    %v234 = vrot.slane %v233, 4
    %v235 = vadd.f32 %v233, %v234
    %v236 = vrot.slane %v235, 2
    %v237 = vadd.f32 %v235, %v236
    %v238 = vrot.slane %v237, 1
    %v239 = vadd.f32 %v237, %v238
    %v240 = vadd.f32 %v188, %v190
    %v241 = vrot.slane %v240, 4
    %v242 = vadd.f32 %v240, %v241
    %v243 = vrot.slane %v242, 2
    %v244 = vadd.f32 %v242, %v243
    %v245 = vrot.slane %v244, 1
    %v246 = vadd.f32 %v244, %v245
    %s247 = sld [smem:[#allocation3 + $0x1]]
    %v248 = vstv %s247
    %v249 = vadd.f32 %v197, %v248
    %v250 = vadd.f32 %v204, %v248
    %v251 = vadd.f32 %v211, %v248
    %v252 = vadd.f32 %v218, %v248
    %v253 = vadd.f32 %v225, %v248
    %v254 = vadd.f32 %v232, %v248
    %v255 = vadd.f32 %v239, %v248
    %v256 = vadd.f32 %v246, %v248
    %v257 = vmax.f32 %v249, 0.0
    %v258 = vmax.f32 %v250, 0.0
    %v259 = vmax.f32 %v251, 0.0
    %v260 = vmax.f32 %v252, 0.0
    %v261 = vmax.f32 %v253, 0.0
    %v262 = vmax.f32 %v254, 0.0
    %v263 = vmax.f32 %v255, 0.0
    %v264 = vmax.f32 %v256, 0.0
    %266 = vset.pattern.permute.xlu0 0
    %267 = vperm.xlu0 %266, %v59
    %v268 = vpop.permute.xlu0 %267
    %271 = vset.pattern.permute.xlu0 0
    %272 = vperm.xlu0 %271, %v60
    %v273 = vpop.permute.xlu0 %272
    %v275 = vmul.f32 %v157, %v268
    %v276 = vmul.f32 %v158, %v268
    %v277 = vmul.f32 %v157, %v273
    %v278 = vmul.f32 %v158, %v273
    %v279 = vmul.f32 %v159, %v268
    %v280 = vmul.f32 %v160, %v268
    %v281 = vmul.f32 %v159, %v273
    %v282 = vmul.f32 %v160, %v273
    %v283 = vmul.f32 %v161, %v268
    %v284 = vmul.f32 %v162, %v268
    %v285 = vmul.f32 %v161, %v273
    %v286 = vmul.f32 %v162, %v273
    %v287 = vmul.f32 %v163, %v268
    %v288 = vmul.f32 %v164, %v268
    %v289 = vmul.f32 %v163, %v273
    %v290 = vmul.f32 %v164, %v273
    %292 = vset.pattern.permute.xlu0 0
    %293 = vperm.xlu0 %292, %v61
    %v294 = vpop.permute.xlu0 %293
    %297 = vset.pattern.permute.xlu0 0
    %298 = vperm.xlu0 %297, %v62
    %v299 = vpop.permute.xlu0 %298
    %v301 = vmul.f32 %v257, %v294
    %v302 = vmul.f32 %v258, %v294
    %v303 = vmul.f32 %v257, %v299
    %v304 = vmul.f32 %v258, %v299
    %v305 = vmul.f32 %v259, %v294
    %v306 = vmul.f32 %v260, %v294
    %v307 = vmul.f32 %v259, %v299
    %v308 = vmul.f32 %v260, %v299
    %v309 = vmul.f32 %v261, %v294
    %v310 = vmul.f32 %v262, %v294
    %v311 = vmul.f32 %v261, %v299
    %v312 = vmul.f32 %v262, %v299
    %v313 = vmul.f32 %v263, %v294
    %v314 = vmul.f32 %v264, %v294
    %v315 = vmul.f32 %v263, %v299
    %v316 = vmul.f32 %v264, %v299
    %v317 = vadd.f32 %v275, %v301
    %v318 = vadd.f32 %v276, %v302
    %v319 = vadd.f32 %v277, %v303
    %v320 = vadd.f32 %v278, %v304
    %v321 = vadd.f32 %v279, %v305
    %v322 = vadd.f32 %v280, %v306
    %v323 = vadd.f32 %v281, %v307
    %v324 = vadd.f32 %v282, %v308
    %v325 = vadd.f32 %v283, %v309
    %v326 = vadd.f32 %v284, %v310
    %v327 = vadd.f32 %v285, %v311
    %v328 = vadd.f32 %v286, %v312
    %v329 = vadd.f32 %v287, %v313
    %v330 = vadd.f32 %v288, %v314
    %v331 = vadd.f32 %v289, %v315
    %v332 = vadd.f32 %v290, %v316
    %334 = vset.pattern.permute.xlu0 0
    %335 = vperm.xlu0 %334, %v63
    %v336 = vpop.permute.xlu0 %335
    %339 = vset.pattern.permute.xlu0 0
    %340 = vperm.xlu0 %339, %v64
    %v341 = vpop.permute.xlu0 %340
    %v343 = vadd.f32 %v317, %v336
    %v344 = vadd.f32 %v318, %v336
    %v345 = vadd.f32 %v319, %v341
    %v346 = vadd.f32 %v320, %v341
    %v347 = vadd.f32 %v321, %v336
    %v348 = vadd.f32 %v322, %v336
    %v349 = vadd.f32 %v323, %v341
    %v350 = vadd.f32 %v324, %v341
    %v351 = vadd.f32 %v325, %v336
    %v352 = vadd.f32 %v326, %v336
    %v353 = vadd.f32 %v327, %v341
    %v354 = vadd.f32 %v328, %v341
    %v355 = vadd.f32 %v329, %v336
    %v356 = vadd.f32 %v330, %v336
    %v357 = vadd.f32 %v331, %v341
    %v358 = vadd.f32 %v332, %v341
    %v359 = vsub.f32 0.0, %v343
    %v360 = vsub.f32 0.0, %v344
    %v361 = vsub.f32 0.0, %v345
    %v362 = vsub.f32 0.0, %v346
    %v363 = vsub.f32 0.0, %v347
    %v364 = vsub.f32 0.0, %v348
    %v365 = vsub.f32 0.0, %v349
    %v366 = vsub.f32 0.0, %v350
    %v367 = vsub.f32 0.0, %v351
    %v368 = vsub.f32 0.0, %v352
    %v369 = vsub.f32 0.0, %v353
    %v370 = vsub.f32 0.0, %v354
    %v371 = vsub.f32 0.0, %v355
    %v372 = vsub.f32 0.0, %v356
    %v373 = vsub.f32 0.0, %v357
    %v374 = vsub.f32 0.0, %v358
    %v375 = vmul.f32 %v359, 1.442695
    %v376 = vpow.pop %v375
    %v377 = vmul.f32 %v360, 1.442695
    %v378 = vpow.pop %v377
    %v379 = vmul.f32 %v361, 1.442695
    %v380 = vpow.pop %v379
    %v381 = vmul.f32 %v362, 1.442695
    %v382 = vpow.pop %v381
    %v383 = vmul.f32 %v363, 1.442695
    %v384 = vpow.pop %v383
    %v385 = vmul.f32 %v364, 1.442695
    %v386 = vpow.pop %v385
    %v387 = vmul.f32 %v365, 1.442695
    %v388 = vpow.pop %v387
    %v389 = vmul.f32 %v366, 1.442695
    %v390 = vpow.pop %v389
    %v391 = vmul.f32 %v367, 1.442695
    %v392 = vpow.pop %v391
    %v393 = vmul.f32 %v368, 1.442695
    %v394 = vpow.pop %v393
    %v395 = vmul.f32 %v369, 1.442695
    %v396 = vpow.pop %v395
    %v397 = vmul.f32 %v370, 1.442695
    %v398 = vpow.pop %v397
    %v399 = vmul.f32 %v371, 1.442695
    %v400 = vpow.pop %v399
    %v401 = vmul.f32 %v372, 1.442695
    %v402 = vpow.pop %v401
    %v403 = vmul.f32 %v373, 1.442695
    %v404 = vpow.pop %v403
    %v405 = vmul.f32 %v374, 1.442695
    %v406 = vpow.pop %v405
    %v407 = vadd.f32 %v376, 1.0
    %v408 = vadd.f32 %v378, 1.0
    %v409 = vadd.f32 %v380, 1.0
    %v410 = vadd.f32 %v382, 1.0
    %v411 = vadd.f32 %v384, 1.0
    %v412 = vadd.f32 %v386, 1.0
    %v413 = vadd.f32 %v388, 1.0
    %v414 = vadd.f32 %v390, 1.0
    %v415 = vadd.f32 %v392, 1.0
    %v416 = vadd.f32 %v394, 1.0
    %v417 = vadd.f32 %v396, 1.0
    %v418 = vadd.f32 %v398, 1.0
    %v419 = vadd.f32 %v400, 1.0
    %v420 = vadd.f32 %v402, 1.0
    %v421 = vadd.f32 %v404, 1.0
    %v422 = vadd.f32 %v406, 1.0
    %v423 = vrcp.pop %v407
    %v424 = vrcp.pop %v408
    %v425 = vrcp.pop %v409
    %v426 = vrcp.pop %v410
    %v427 = vrcp.pop %v411
    %v428 = vrcp.pop %v412
    %v429 = vrcp.pop %v413
    %v430 = vrcp.pop %v414
    %v431 = vrcp.pop %v415
    %v432 = vrcp.pop %v416
    %v433 = vrcp.pop %v417
    %v434 = vrcp.pop %v418
    %v435 = vrcp.pop %v419
    %v436 = vrcp.pop %v420
    %v437 = vrcp.pop %v421
    %v438 = vrcp.pop %v422
    %v439 = vmul.f32 %v39, %v423
    %v440 = vmul.f32 %v40, %v424
    %v441 = vmul.f32 %v41, %v425
    %v442 = vmul.f32 %v42, %v426
    %v443 = vmul.f32 %v43, %v427
    %v444 = vmul.f32 %v44, %v428
    %v445 = vmul.f32 %v45, %v429
    %v446 = vmul.f32 %v46, %v430
    %v447 = vmul.f32 %v47, %v431
    %v448 = vmul.f32 %v48, %v432
    %v449 = vmul.f32 %v49, %v433
    %v450 = vmul.f32 %v50, %v434
    %v451 = vmul.f32 %v51, %v435
    %v452 = vmul.f32 %v52, %v436
    %v453 = vmul.f32 %v53, %v437
    %v454 = vmul.f32 %v54, %v438
    %v455 = vadd.f32 %v439, %v39
    %v456 = vadd.f32 %v440, %v40
    %v457 = vadd.f32 %v441, %v41
    %v458 = vadd.f32 %v442, %v42
    %v459 = vadd.f32 %v443, %v43
    %v460 = vadd.f32 %v444, %v44
    %v461 = vadd.f32 %v445, %v45
    %v462 = vadd.f32 %v446, %v46
    %v463 = vadd.f32 %v447, %v47
    %v464 = vadd.f32 %v448, %v48
    %v465 = vadd.f32 %v449, %v49
    %v466 = vadd.f32 %v450, %v50
    %v467 = vadd.f32 %v451, %v51
    %v468 = vadd.f32 %v452, %v52
    %v469 = vadd.f32 %v453, %v53
    %v470 = vadd.f32 %v454, %v54
    %v471 = vadd.f32 %v455, %v459
    %v472 = vadd.f32 %v471, %v463
    %v473 = vadd.f32 %v472, %v467
    %v474 = vadd.f32 %v456, %v460
    %v475 = vadd.f32 %v474, %v464
    %v476 = vadd.f32 %v475, %v468
    %v477 = vadd.f32 %v457, %v461
    %v478 = vadd.f32 %v477, %v465
    %v479 = vadd.f32 %v478, %v469
    %v480 = vadd.f32 %v458, %v462
    %v481 = vadd.f32 %v480, %v466
    %v482 = vadd.f32 %v481, %v470
    %v483 = vrcp.pop 4.0
    %v484 = vmul.f32 %v473, %v483
    %v485 = vmul.f32 %v476, %v483
    %v486 = vmul.f32 %v479, %v483
    %v487 = vmul.f32 %v482, %v483
    %v488 = vsub.f32 %v455, %v484
    %v489 = vsub.f32 %v456, %v485
    %v490 = vsub.f32 %v457, %v486
    %v491 = vsub.f32 %v458, %v487
    %v492 = vsub.f32 %v459, %v484
    %v493 = vsub.f32 %v460, %v485
    %v494 = vsub.f32 %v461, %v486
    %v495 = vsub.f32 %v462, %v487
    %v496 = vsub.f32 %v463, %v484
    %v497 = vsub.f32 %v464, %v485
    %v498 = vsub.f32 %v465, %v486
    %v499 = vsub.f32 %v466, %v487
    %v500 = vsub.f32 %v467, %v484
    %v501 = vsub.f32 %v468, %v485
    %v502 = vsub.f32 %v469, %v486
    %v503 = vsub.f32 %v470, %v487
    %v504 = vmul.f32 %v488, %v488
    %v505 = vmul.f32 %v489, %v489
    %v506 = vmul.f32 %v490, %v490
    %v507 = vmul.f32 %v491, %v491
    %v508 = vmul.f32 %v492, %v492
    %v509 = vmul.f32 %v493, %v493
    %v510 = vmul.f32 %v494, %v494
    %v511 = vmul.f32 %v495, %v495
    %v512 = vmul.f32 %v496, %v496
    %v513 = vmul.f32 %v497, %v497
    %v514 = vmul.f32 %v498, %v498
    %v515 = vmul.f32 %v499, %v499
    %v516 = vmul.f32 %v500, %v500
    %v517 = vmul.f32 %v501, %v501
    %v518 = vmul.f32 %v502, %v502
    %v519 = vmul.f32 %v503, %v503
    %v520 = vadd.f32 %v504, %v508
    %v521 = vadd.f32 %v520, %v512
    %v522 = vadd.f32 %v521, %v516
    %v523 = vadd.f32 %v505, %v509
    %v524 = vadd.f32 %v523, %v513
    %v525 = vadd.f32 %v524, %v517
    %v526 = vadd.f32 %v506, %v510
    %v527 = vadd.f32 %v526, %v514
    %v528 = vadd.f32 %v527, %v518
    %v529 = vadd.f32 %v507, %v511
    %v530 = vadd.f32 %v529, %v515
    %v531 = vadd.f32 %v530, %v519
    %v532 = vmul.f32 %v522, %v483
    %v533 = vmul.f32 %v525, %v483
    %v534 = vmul.f32 %v528, %v483
    %v535 = vmul.f32 %v531, %v483
    %v536 = vadd.f32 %v532, 1e-05
    %v537 = vadd.f32 %v533, 1e-05
    %v538 = vadd.f32 %v534, 1e-05
    %v539 = vadd.f32 %v535, 1e-05
    %v540 = vrsqrt.pop %v536
    %v541 = vrsqrt.pop %v537
    %v542 = vrsqrt.pop %v538
    %v543 = vrsqrt.pop %v539
    %v544 = vld [vmem:[%s3] sm:$0xff]
    %v545 = vld [vmem:[%s3 + $0x8] sm:$0xff]
    %v546 = vld [vmem:[%s3 + $0x10] sm:$0xff]
    %v547 = vld [vmem:[%s3 + $0x18] sm:$0xff]
    %v548 = vmul.f32 %v544, %v540
    %v549 = vmul.f32 %v545, %v541
    %v550 = vmul.f32 %v546, %v542
    %v551 = vmul.f32 %v547, %v543
    %v552 = vld [vmem:[%s4] sm:$0xff]
    %v553 = vld [vmem:[%s4 + $0x8] sm:$0xff]
    %v554 = vld [vmem:[%s4 + $0x10] sm:$0xff]
    %v555 = vld [vmem:[%s4 + $0x18] sm:$0xff]
    %v556 = vmul.f32 %v484, %v548
    %v557 = vmul.f32 %v485, %v549
    %v558 = vmul.f32 %v486, %v550
    %v559 = vmul.f32 %v487, %v551
    %v560 = vsub.f32 %v552, %v556
    %v561 = vsub.f32 %v553, %v557
    %v562 = vsub.f32 %v554, %v558
    %v563 = vsub.f32 %v555, %v559
    %v564 = vmul.f32 %v455, %v548
    %v565 = vmul.f32 %v456, %v549
    %v566 = vmul.f32 %v457, %v550
    %v567 = vmul.f32 %v458, %v551
    %v568 = vmul.f32 %v459, %v548
    %v569 = vmul.f32 %v460, %v549
    %v570 = vmul.f32 %v461, %v550
    %v571 = vmul.f32 %v462, %v551
    %v572 = vmul.f32 %v463, %v548
    %v573 = vmul.f32 %v464, %v549
    %v574 = vmul.f32 %v465, %v550
    %v575 = vmul.f32 %v466, %v551
    %v576 = vmul.f32 %v467, %v548
    %v577 = vmul.f32 %v468, %v549
    %v578 = vmul.f32 %v469, %v550
    %v579 = vmul.f32 %v470, %v551
    %v580 = vadd.f32 %v564, %v560
    %v581 = vadd.f32 %v565, %v561
    %v582 = vadd.f32 %v566, %v562
    %v583 = vadd.f32 %v567, %v563
    %v584 = vadd.f32 %v568, %v560
    %v585 = vadd.f32 %v569, %v561
    %v586 = vadd.f32 %v570, %v562
    %v587 = vadd.f32 %v571, %v563
    %v588 = vadd.f32 %v572, %v560
    %v589 = vadd.f32 %v573, %v561
    %v590 = vadd.f32 %v574, %v562
    %v591 = vadd.f32 %v575, %v563
    %v592 = vadd.f32 %v576, %v560
    %v593 = vadd.f32 %v577, %v561
    %v594 = vadd.f32 %v578, %v562
    %v595 = vadd.f32 %v579, %v563
    %596 = vst [vmem:[#allocation7] sm:$0xff] %v580
    %597 = vst [vmem:[#allocation7 + $0x8] sm:$0xff] %v581
    %598 = vst [vmem:[#allocation7 + $0x10] sm:$0xff] %v582
    %599 = vst [vmem:[#allocation7 + $0x18] sm:$0xff] %v583
    %600 = vst [vmem:[#allocation7 + $0x20] sm:$0xff] %v584
    %601 = vst [vmem:[#allocation7 + $0x28] sm:$0xff] %v585
    %602 = vst [vmem:[#allocation7 + $0x30] sm:$0xff] %v586
    %603 = vst [vmem:[#allocation7 + $0x38] sm:$0xff] %v587
    %604 = vst [vmem:[#allocation7 + $0x40] sm:$0xff] %v588
    %605 = vst [vmem:[#allocation7 + $0x48] sm:$0xff] %v589
    %606 = vst [vmem:[#allocation7 + $0x50] sm:$0xff] %v590
    %607 = vst [vmem:[#allocation7 + $0x58] sm:$0xff] %v591
    %608 = vst [vmem:[#allocation7 + $0x60] sm:$0xff] %v592
    %609 = vst [vmem:[#allocation7 + $0x68] sm:$0xff] %v593
    %610 = vst [vmem:[#allocation7 + $0x70] sm:$0xff] %v594
    %611 = vst [vmem:[#allocation7 + $0x78] sm:$0xff] %v595
    // Predicated region
    $region22: #{tpu_custom_call.1} parent=1 // pred_check
      _
    $region23: #{tpu_custom_call.1} parent=1 // pred_check_branch
      %613 = sbr.rel (0) target = $region25
    $region24: #{tpu_custom_call.1} parent=1 // pred_region
      %s615 = ssub.s32 2048, 2048
      %616 = vsyncadd [#allocation6], %s615
      %s617 = sshll.u32 [#allocation7], 4
      %s618 = int_to_ptr.vmem [resolvable:$true] %s617
      %623 = dma.vmem_to_hbm [thread:$0]  %s618, 2048, %s5, [#allocation6], 256, 256, 16
    $region25: #{tpu_custom_call.1} parent=1 // pred_fallthru
      _
    // Predicated region
    $region26: #{tpu_custom_call.1} parent=1 // pred_check
      _
    $region27: #{tpu_custom_call.1} parent=1 // pred_check_branch
      %625 = sbr.rel (0) target = $region29
    $region28: #{tpu_custom_call.1} parent=1 // pred_region
      %626 = dma.done [#allocation6], 2048
    $region29: #{tpu_custom_call.1} parent=1 // pred_fallthru
      _
    %627 = vsyncpa [#allocation5], 1
    %628 = vsyncpa [#allocation6], 1

</llo_original>
